<compile_context>
chip_gen: v7x
topology: tpu7x:2x2x1
jax: 0.10.0
libtpu: 0.0.40
codegen_flags: <defaults>
</compile_context>

<pallas_src>
import functools
import math

import jax
import jax.numpy as jnp
from jax import lax
from jax.experimental import pallas as pl
from jax.experimental.pallas import tpu as pltpu


def _int_pow(x, n):
    """x**n for a small non-negative integer n via repeated multiplication."""
    if n == 0:
        return jnp.ones_like(x)
    result = None
    base = x
    while n:
        if n & 1:
            result = base if result is None else result * base
        n >>= 1
        if n:
            base = base * base
    return result


def _focal_loss_kernel(*refs, gamma, hw, tile_hw, needs_mask, has_alpha):
    if has_alpha:
        tgt_ref, x_ref, alpha_ref, out_ref = refs
    else:
        tgt_ref, x_ref, out_ref = refs
        alpha_ref = None

    x = x_ref[0].astype(jnp.float32)           # (C, T): classes on sublanes
    tgt = tgt_ref[0]                           # (1, T) int32
    c, t = x.shape

    # log-softmax over the class (sublane) axis, gathered at the target class.
    m = jnp.max(x, axis=0, keepdims=True)                         # (1, T)
    z = x - m                                                     # (C, T)
    lse = jnp.log(jnp.sum(jnp.exp(z), axis=0, keepdims=True))     # (1, T)

    cls = lax.broadcasted_iota(jnp.int32, (c, t), 0)              # (C, T)
    hit = cls == tgt                                              # (C, T) bool
    # masked select instead of onehot*z: one select + sum, no convert/mul.
    logpt = jnp.sum(jnp.where(hit, z, 0.0), axis=0, keepdims=True) - lse
    pt = jnp.exp(logpt)                                           # (1, T)

    if has_alpha:
        at = jnp.sum(jnp.where(hit, alpha_ref[...], 0.0),
                     axis=0, keepdims=True)                       # (1, T)
        logpt = logpt * at

    w = 1.0 - pt
    if float(gamma).is_integer() and gamma >= 0:
        focal = _int_pow(w, int(gamma))        # gamma=2 -> w*w, no pow/EUP
    else:
        focal = jnp.power(w, jnp.float32(gamma))

    loss = -focal * logpt                                          # (1, T)

    def _emit(vals):
        # lane-dense (8,128) write; single cross-lane reduce per step.
        out_ref[...] = jnp.zeros((1, 1, 8, 128), jnp.float32) + jnp.sum(vals)

    if needs_mask:
        last_j = pl.num_programs(0) - 1

        @pl.when(pl.program_id(0) != last_j)
        def _():
            _emit(loss)

        @pl.when(pl.program_id(0) == last_j)
        def _():
            # select (not multiply) so OOB-lane NaN/Inf garbage is removed.
            pos = pl.program_id(0) * tile_hw + lax.broadcasted_iota(
                jnp.int32, (1, t), 1)
            _emit(jnp.where(pos < hw, loss, 0.0))
    else:
        _emit(loss)


def _tpu_vmem_capacity_bytes():
    """Physical VMEM per core; conservative (v7x-sized) fallback on failure."""
    try:
        info = pltpu.get_tpu_info()
        cap = getattr(info, "vmem_capacity_bytes", None)
        if cap:
            return int(cap)
    except Exception:
        pass
    return 64 << 20


def _pick_tile_hw(hw, c, lane_cap):
    # ~2 MiB of f32 logits per block, lane-width a multiple of 128, capped by
    # a generation-aware lane cap so 8-sublane-padded f32 temporaries plus
    # double-buffered inputs stay well inside scoped VMEM.
    budget = max((2 << 20) // (4 * max(c, 1)), 128)
    cap = min((budget // 128) * 128, lane_cap)
    return min(hw, cap)


def focal_loss(logits, target, *, gamma=2, alpha=None, size_average=True,
               tile_hw=None):
    """Focal loss matching the PyTorch reference forward pass.

    logits: (N, C, H, W) (or (N, C, ...) / (M, C)) float logits.  bf16 logits
            are accepted directly (upcast to f32 happens per-tile in-kernel).
    target: matching integer class indices in [0, C)
    """
    if logits.ndim == 2:
        # (M, C) fallback: materializes logits.T in HBM (extra read+write of
        # the logits) -- numerically fine, flagged as a traffic penalty.
        c = logits.shape[1]
        n, hw = 1, logits.shape[0]
        x = logits.T[None]                         # (1, C, M)
        tgt = target.reshape(1, 1, hw)
    else:
        n, c = logits.shape[0], logits.shape[1]
        hw = math.prod(logits.shape[2:])
        x = logits.reshape(n, c, hw)               # free reshape of NCHW
        tgt = target.reshape(n, 1, hw)
    tgt = tgt.astype(jnp.int32)

    # alpha handling (float/int -> [a, 1-a], list -> tensor, None -> absent)
    if alpha is None:
        alpha_vec = None
    elif isinstance(alpha, (float, int)) and not isinstance(alpha, bool):
        assert c == 2, "scalar alpha implies binary classification (C == 2)"
        alpha_vec = jnp.array([[float(alpha)], [1.0 - float(alpha)]],
                              dtype=jnp.float32)
    else:
        alpha_vec = jnp.asarray(alpha, dtype=jnp.float32).reshape(c, 1)

    vmem_cap = _tpu_vmem_capacity_bytes()
    # 128-MiB parts (v5e/v6e) can take a bigger lane tile; 64-MiB v7x stays
    # at 64K lanes.  Raise scoped VMEM explicitly (v5e default is only 16 MiB)
    # while staying well under the physical ceiling.
    lane_cap = 131072 if vmem_cap >= (100 << 20) else 65536
    vmem_limit = min((vmem_cap * 3) // 4, 96 << 20)

    if tile_hw is None:
        tile_hw = _pick_tile_hw(hw, c, lane_cap)
    grid_hw = pl.cdiv(hw, tile_hw)
    needs_mask = (hw % tile_hw) != 0

    kernel = functools.partial(
        _focal_loss_kernel, gamma=float(gamma), hw=hw, tile_hw=tile_hw,
        needs_mask=needs_mask, has_alpha=alpha_vec is not None)

    in_specs = [
        pl.BlockSpec((1, 1, tile_hw), lambda j, b: (b, 0, j)),   # target
        pl.BlockSpec((1, c, tile_hw), lambda j, b: (b, 0, j)),   # logits
    ]
    args = [tgt, x]
    if alpha_vec is not None:
        in_specs.append(pl.BlockSpec((c, 1), lambda j, b: (0, 0)))
        args.append(alpha_vec)

    partials = pl.pallas_call(
        kernel,
        out_shape=jax.ShapeDtypeStruct((grid_hw, n, 8, 128), jnp.float32),
        grid_spec=pltpu.PrefetchScalarGridSpec(
            num_scalar_prefetch=0,
            grid=(grid_hw, n),                     # both axes independent
            in_specs=in_specs,
            out_specs=pl.BlockSpec((1, 1, 8, 128),
                                   lambda j, b: (j, b, 0, 0)),
        ),
        compiler_params=pltpu.CompilerParams(
            dimension_semantics=("parallel", "parallel"),
            vmem_limit_bytes=int(vmem_limit)),
    )(*args)

    total = jnp.sum(partials[:, :, 0, 0])
    if size_average:
        total = total / jnp.float32(n * hw)
    return total


def _focal_loss_ref(logits_nchw, target_nhw, gamma=2, alpha=None,
                    size_average=True):
    n, c = logits_nchw.shape[0], logits_nchw.shape[1]
    x = jnp.moveaxis(logits_nchw.reshape(n, c, -1), 1, 2).reshape(-1, c)
    tgt = target_nhw.reshape(-1)
    logp = jax.nn.log_softmax(x.astype(jnp.float32), axis=1)
    logpt = jnp.take_along_axis(logp, tgt[:, None], axis=1)[:, 0]
    pt = jnp.exp(logpt)
    if alpha is not None:
        if isinstance(alpha, (float, int)):
            a = jnp.array([alpha, 1.0 - alpha], dtype=jnp.float32)
        else:
            a = jnp.asarray(alpha, dtype=jnp.float32)
        logpt = logpt * a[tgt]
    loss = -1.0 * (1.0 - pt) ** gamma * logpt
    return loss.mean() if size_average else loss.sum()


if __name__ == "__main__":
    key = jax.random.PRNGKey(0)
    k1, k2 = jax.random.split(key)

    N, C, H, W = 2, 4, 16, 16
    logits = jax.random.normal(k1, (N, C, H, W), dtype=jnp.float32)
    target = jax.random.randint(k2, (N, H, W), 0, C, dtype=jnp.int32)

    # default module config: gamma=2, alpha=None, size_average=True
    out = focal_loss(logits, target, gamma=2, alpha=None, size_average=True)
    out = jax.block_until_ready(out)
    ref = _focal_loss_ref(logits, target, gamma=2, alpha=None,
                          size_average=True)
    assert jnp.allclose(out, ref, rtol=1e-5, atol=1e-5), (out, ref)

    # alpha-list path
    out_a = focal_loss(logits, target, gamma=2, alpha=[0.1, 0.2, 0.3, 0.4])
    out_a = jax.block_until_ready(out_a)
    ref_a = _focal_loss_ref(logits, target, gamma=2,
                            alpha=[0.1, 0.2, 0.3, 0.4])
    assert jnp.allclose(out_a, ref_a, rtol=1e-5, atol=1e-5), (out_a, ref_a)

    # size_average=False path
    out_s = focal_loss(logits, target, gamma=2, alpha=None,
                       size_average=False)
    out_s = jax.block_until_ready(out_s)
    ref_s = _focal_loss_ref(logits, target, gamma=2, alpha=None,
                            size_average=False)
    assert jnp.allclose(out_s, ref_s, rtol=1e-5, atol=1e-4), (out_s, ref_s)

    # bf16 logits path (HBM traffic halved; upcast happens in-kernel)
    logits_bf16 = logits.astype(jnp.bfloat16)
    out_b = focal_loss(logits_bf16, target, gamma=2, alpha=None,
                       size_average=True)
    out_b = jax.block_until_ready(out_b)
    ref_b = _focal_loss_ref(logits_bf16.astype(jnp.float32), target, gamma=2,
                            alpha=None, size_average=True)
    assert jnp.allclose(out_b, ref_b, rtol=1e-5, atol=1e-5), (out_b, ref_b)

    # ragged-tail path (hw not a multiple of the forced tile)
    out_r = focal_loss(logits, target, gamma=2, alpha=None,
                       size_average=True, tile_hw=128)
    out_r = jax.block_until_ready(out_r)
    assert jnp.allclose(out_r, ref, rtol=1e-5, atol=1e-5), (out_r, ref)

    print("KERNEL_OK")
</pallas_src>

<mosaic_0001>
module attributes {stable_mosaic.version = 11 : i64} {
  func.func @_focal_loss_kernel(%arg0: i32, %arg1: i32, %arg2: memref<1x1x256xi32, #tpu.memory_space<vmem>>, %arg3: memref<1x4x256xf32, #tpu.memory_space<vmem>>, %arg4: memref<1x1x8x128xf32, #tpu.memory_space<vmem>>) attributes {dimension_semantics = [#tpu.dimension_semantics<parallel>, #tpu.dimension_semantics<parallel>], iteration_bounds = array<i64: 1, 2>, scalar_prefetch = 0 : i64, scratch_operands = 0 : i64, tpu.core_type = #tpu.core_type<tc>, window_params = [{transform_indices = @transform_0, window_bounds = array<i64: 1, 1, 256>}, {transform_indices = @transform_1, window_bounds = array<i64: 1, 4, 256>}, {transform_indices = @transform_2, window_bounds = array<i64: 1, 1, 8, 128>}]} {
    %c0 = arith.constant 0 : index
    %c0_0 = arith.constant 0 : index
    %c0_1 = arith.constant 0 : index
    %0 = vector.load %arg3[%c0, %c0_0, %c0_1] : memref<1x4x256xf32, #tpu.memory_space<vmem>>, vector<1x4x256xf32>
    %1 = vector.shape_cast %0 : vector<1x4x256xf32> to vector<4x256xf32>
    %c0_2 = arith.constant 0 : index
    %c0_3 = arith.constant 0 : index
    %c0_4 = arith.constant 0 : index
    %2 = vector.load %arg2[%c0_2, %c0_3, %c0_4] : memref<1x1x256xi32, #tpu.memory_space<vmem>>, vector<1x1x256xi32>
    %3 = vector.shape_cast %2 : vector<1x1x256xi32> to vector<1x256xi32>
    %cst = arith.constant dense<0xFF800000> : vector<256xf32>
    %4 = vector.multi_reduction <maximumf>, %1, %cst [0] : vector<4x256xf32> to vector<256xf32>
    %5 = vector.shape_cast %4 : vector<256xf32> to vector<1x256xf32>
    %6 = vector.broadcast %5 : vector<1x256xf32> to vector<4x256xf32>
    %7 = arith.subf %1, %6 : vector<4x256xf32>
    %8 = math.exp %7 : vector<4x256xf32>
    %cst_5 = arith.constant dense<0.000000e+00> : vector<256xf32>
    %9 = vector.multi_reduction <add>, %8, %cst_5 [0] : vector<4x256xf32> to vector<256xf32>
    %10 = vector.shape_cast %9 : vector<256xf32> to vector<1x256xf32>
    %11 = math.log %10 : vector<1x256xf32>
    %12 = tpu.iota {dimensions = array<i32: 0>} : vector<4x256xi32>
    %13 = vector.broadcast %3 : vector<1x256xi32> to vector<4x256xi32>
    %14 = arith.cmpi eq, %12, %13 : vector<4x256xi32>
    %cst_6 = arith.constant 0.000000e+00 : f32
    %15 = vector.broadcast %cst_6 : f32 to vector<4x256xf32>
    %16 = arith.select %14, %7, %15 : vector<4x256xi1>, vector<4x256xf32>
    %cst_7 = arith.constant dense<0.000000e+00> : vector<256xf32>
    %17 = vector.multi_reduction <add>, %16, %cst_7 [0] : vector<4x256xf32> to vector<256xf32>
    %18 = vector.shape_cast %17 : vector<256xf32> to vector<1x256xf32>
    %19 = arith.subf %18, %11 : vector<1x256xf32>
    %20 = math.exp %19 : vector<1x256xf32>
    %cst_8 = arith.constant 1.000000e+00 : f32
    %21 = vector.broadcast %cst_8 : f32 to vector<1x256xf32>
    %22 = arith.subf %21, %20 : vector<1x256xf32>
    %23 = arith.mulf %22, %22 : vector<1x256xf32>
    %cst_9 = arith.constant 0.000000e+00 : f32
    %24 = vector.broadcast %cst_9 : f32 to vector<1x256xf32>
    %25 = arith.subf %24, %23 : vector<1x256xf32>
    %26 = arith.mulf %25, %19 : vector<1x256xf32>
    %cst_10 = arith.constant 0.000000e+00 : f32
    %27 = vector.broadcast %cst_10 : f32 to vector<1x1x8x128xf32>
    %28 = vector.shape_cast %26 : vector<1x256xf32> to vector<1x1x256xf32>
    %cst_11 = arith.constant dense<0.000000e+00> : vector<1xf32>
    %29 = vector.multi_reduction <add>, %28, %cst_11 [1, 2] : vector<1x1x256xf32> to vector<1xf32>
    %30 = vector.shape_cast %29 : vector<1xf32> to vector<1x1x1xf32>
    %31 = vector.extract %30[0, 0, 0] : f32 from vector<1x1x1xf32>
    %32 = vector.broadcast %31 : f32 to vector<1x1x8x128xf32>
    %33 = arith.addf %27, %32 : vector<1x1x8x128xf32>
    %c0_12 = arith.constant 0 : index
    %c0_13 = arith.constant 0 : index
    %c0_14 = arith.constant 0 : index
    %c0_15 = arith.constant 0 : index
    %34 = vector.load %arg4[%c0_12, %c0_13, %c0_14, %c0_15] : memref<1x1x8x128xf32, #tpu.memory_space<vmem>>, vector<1x1x8x128xf32>
    tpu.vector_store %arg4[%c0_12, %c0_13, %c0_14, %c0_15], %33 {strides = array<i32>} : memref<1x1x8x128xf32, #tpu.memory_space<vmem>>, vector<1x1x8x128xf32>,
    return
  }
  func.func @transform_0(%arg0: i32, %arg1: i32) -> (i32, i32, i32) {
    %c0_i32 = arith.constant 0 : i32
    %c0_i32_0 = arith.constant 0 : i32
    return %arg1, %c0_i32, %arg0 : i32, i32, i32
  }
  func.func @transform_1(%arg0: i32, %arg1: i32) -> (i32, i32, i32) {
    %c0_i32 = arith.constant 0 : i32
    %c0_i32_0 = arith.constant 0 : i32
    return %arg1, %c0_i32, %arg0 : i32, i32, i32
  }
  func.func @transform_2(%arg0: i32, %arg1: i32) -> (i32, i32, i32, i32) {
    %c0_i32 = arith.constant 0 : i32
    %c0_i32_0 = arith.constant 0 : i32
    %c0_i32_1 = arith.constant 0 : i32
    return %arg0, %arg1, %c0_i32, %c0_i32_0 : i32, i32, i32, i32
  }
}

</mosaic_0001>

<llo_original>
// kernel: tpu_custom_call.1
$region0: #{tpu_custom_call.1}
  #allocation0 [shape = 'u32[]', space=smem, size = 0x4, offset = 0x4, fixed_abs, tag = 'smem constant byte address 0x4 - core index']
  #allocation1 [shape = 'u32[144,128]{1,0:T(1,128)}', space=vmem, size = 0x12000, scoped, tag = 'internal scratch']
  %s0 = inlined_call_operand.hbm [shape: s32[2,1,256], index: 0, kind: input, shape index: {}]
  %s1 = inlined_call_operand.hbm [shape: f32[2,4,256], index: 1, kind: input, shape index: {}]
  %s2 = inlined_call_operand.hbm [shape: f32[1,2,8,128], index: 2, kind: output, shape index: {}]
  %s3 = sld [smem:[#allocation0]]
  $region49: #{tpu_custom_call.1} parent=0
    _
  %s5 = ssub.s32 1, %s3
  %s6 = scalar_select 0, %s5, %s3
  $region1: #{tpu_custom_call.1} parent=0
    #allocation2 [shape = 'u8[2048]{0}', space=vmem, size = 0x800, scoped, tag = 'input window, operand 0']
    #allocation3 [shape = 's32[2]{0}', space=sflag, size = 0x8, scoped, tag = 'scoped memory for tpu_custom_call.1']
    #allocation4 [shape = 's32[2]{0}', space=sflag, size = 0x8, scoped, tag = 'scoped memory for tpu_custom_call.1']
    #allocation5 [shape = 'u8[8192]{0}', space=vmem, size = 0x2000, scoped, tag = 'input window, operand 1']
    #allocation6 [shape = 's32[2]{0}', space=sflag, size = 0x8, scoped, tag = 'scoped memory for tpu_custom_call.1']
    #allocation7 [shape = 'u8[8192]{0}', space=vmem, size = 0x2000, scoped, tag = 'output window, operand 0']
    %7 = vsyncpa [#allocation3], 0
    %s8 = scalar_lea.sflag [#allocation3], 1
    %9 = vsyncpa %s8, 0
    %10 = vsyncpa [#allocation6], 0
    %s11 = scalar_lea.sflag [#allocation6], 1
    %12 = vsyncpa %s11, 0
    %13 = vsyncpa [#allocation4], 0
    %s14 = scalar_lea.sflag [#allocation4], 1
    %15 = vsyncpa %s14, 0
    loop: start=0, step=1, limit=4
    $region2: #{tpu_custom_call.1} parent=1 // loop_pre_header
      _
    $region3: #{tpu_custom_call.1} parent=1 // loop_header
      %s17 = sphi 0, %s21
      %p18 = scmp.ge.s32.totalorder %s17, 4
      %s24 = sphi 0, %s36
      %s25 = sphi 0, %s32
      %s26 = sphi 0, %s24
      %s27 = sphi 0, %s25
      %s28 = sphi 0, %s26
      %s29 = sphi 0, %s27
      %s41 = sphi 0, %s43
      %s44 = sphi 0, %s41
      %s45 = sphi 0, %s44
      %s61 = sphi 0, %s45
      %s69 = sphi 0, %s71
      %s72 = sphi 0, %s69
      %s73 = sphi 0, %s72
      %s89 = sphi 0, %s73
      %s97 = sphi 0, %s99
      %s100 = sphi 0, %s97
      %s101 = sphi 0, %s100
      %s117 = sphi 0, %s101
    $region4: #{tpu_custom_call.1} parent=1 // loop_header_branch
      %20 = sbr.rel (%p18) target = $region8
    $region5: #{tpu_custom_call.1} parent=1 // loop_body
      %s22 = ssub.s32 %s17, 1
      %s23 = ssub.s32 %s17, 2
      %s30 = sadd.s32 1, %s25
      %p31 = scmp.ge.s32.totalorder %s30, 2
      %s32 = scalar_select %p31, 0, %s30
      %s33 = sadd.s32 1, %s24
      %s34 = scalar_select %p31, %s33, %s24
      %p35 = scmp.ge.s32.totalorder %s34, 1
      %s36 = scalar_select %p35, 0, %s34
      %s37 = ssub.s32 %s25, %s32
      %s38 = ssub.s32 %s24, %s36
      %s39 = sor.u32 %s37, %s38
      %p40 = scmp.eq.s32.totalorder %s39, 0
      %s42 = sadd.s32 %s41, 1
      %s43 = scalar_select %p40, %s41, %s42
      %p46 = pneg %p40
      %p47 = scmp.eq.s32.totalorder %s17, 1
      %p48 = por %p46, %p47
      %p49 = scmp.ne.s32.totalorder %s41, %s44
      %p50 = scmp.eq.s32.totalorder %s17, 0
      %p51 = por %p49, %p50
      %p52 = scmp.ne.s32.totalorder %s41, %s44
      %p53 = scmp.eq.s32.totalorder %s22, 1
      %p54 = por %p52, %p53
      %p55 = scmp.ne.s32.totalorder %s44, %s45
      %p56 = scmp.eq.s32.totalorder %s22, 0
      %p57 = por %p55, %p56
      %p58 = scmp.ne.s32.totalorder %s44, %s45
      %p59 = scmp.eq.s32.totalorder %s23, 1
      %p60 = por %p58, %p59
      %p62 = scmp.ne.s32.totalorder %s45, %s61
      %p63 = scmp.eq.s32.totalorder %s23, 0
      %p64 = por %p62, %p63
      %s65 = ssub.s32 %s25, %s32
      %s66 = ssub.s32 %s24, %s36
      %s67 = sor.u32 %s65, %s66
      %p68 = scmp.eq.s32.totalorder %s67, 0
      %s70 = sadd.s32 %s69, 1
      %s71 = scalar_select %p68, %s69, %s70
      %p74 = pneg %p68
      %p75 = scmp.eq.s32.totalorder %s17, 1
      %p76 = por %p74, %p75
      %p77 = scmp.ne.s32.totalorder %s69, %s72
      %p78 = scmp.eq.s32.totalorder %s17, 0
      %p79 = por %p77, %p78
      %p80 = scmp.ne.s32.totalorder %s69, %s72
      %p81 = scmp.eq.s32.totalorder %s22, 1
      %p82 = por %p80, %p81
      %p83 = scmp.ne.s32.totalorder %s72, %s73
      %p84 = scmp.eq.s32.totalorder %s22, 0
      %p85 = por %p83, %p84
      %p86 = scmp.ne.s32.totalorder %s72, %s73
      %p87 = scmp.eq.s32.totalorder %s23, 1
      %p88 = por %p86, %p87
      %p90 = scmp.ne.s32.totalorder %s73, %s89
      %p91 = scmp.eq.s32.totalorder %s23, 0
      %p92 = por %p90, %p91
      %s93 = ssub.s32 %s24, %s36
      %s94 = ssub.s32 %s25, %s32
      %s95 = sor.u32 %s93, %s94
      %p96 = scmp.eq.s32.totalorder %s95, 0
      %s98 = sadd.s32 %s97, 1
      %s99 = scalar_select %p96, %s97, %s98
      %p102 = pneg %p96
      %p103 = scmp.eq.s32.totalorder %s17, 1
      %p104 = por %p102, %p103
      %p105 = scmp.ne.s32.totalorder %s97, %s100
      %p106 = scmp.eq.s32.totalorder %s17, 0
      %p107 = por %p105, %p106
      %p108 = scmp.ne.s32.totalorder %s97, %s100
      %p109 = scmp.eq.s32.totalorder %s22, 1
      %p110 = por %p108, %p109
      %p111 = scmp.ne.s32.totalorder %s100, %s101
      %p112 = scmp.eq.s32.totalorder %s22, 0
      %p113 = por %p111, %p112
      %p114 = scmp.ne.s32.totalorder %s100, %s101
      %p115 = scmp.eq.s32.totalorder %s23, 1
      %p116 = por %p114, %p115
      %p118 = scmp.ne.s32.totalorder %s101, %s117
      %p119 = scmp.eq.s32.totalorder %s23, 0
      %p120 = por %p118, %p119
      %p121 = scmp.le.s32.totalorder 1, %s17
      %p122 = scmp.lt.s32.totalorder %s17, 3
      %p123 = pnand %p121, %p122
      %p124 = pneg %p123
      // Predicated region
      $region9: #{tpu_custom_call.1} parent=5 // pred_check
        _
      $region10: #{tpu_custom_call.1} parent=5 // pred_check_branch
        %126 = sbr.rel (%p123) target = $region12
      $region11: #{tpu_custom_call.1} parent=5 // pred_region
        %s127 = ssub.s32 %s17, 1
      $region12: #{tpu_custom_call.1} parent=5 // pred_fallthru
        _
      %p128 = scmp.lt.s32.totalorder %s17, 2
      // Predicated region
      $region13: #{tpu_custom_call.1} parent=5 // pred_check
        %p129 = pneg %p128
      $region14: #{tpu_custom_call.1} parent=5 // pred_check_branch
        %131 = sbr.rel (%p129) target = $region16
      $region15: #{tpu_custom_call.1} parent=5 // pred_region
        // Predicated region
        $region17: #{tpu_custom_call.1} parent=15 // pred_check
          %p132 = pneg %p51
        $region18: #{tpu_custom_call.1} parent=15 // pred_check_branch
          %134 = sbr.rel (%p132) target = $region20
        $region19: #{tpu_custom_call.1} parent=15 // pred_region
          %s135 = sand.u32 %s41, 1
          %s136 = scalar_lea.sflag [#allocation3], %s135
          %s137 = sand.u32 %s41, 1
          %s138 = smul.addr %s137, 2
          %s139 = scalar_lea.vmem [#allocation2], %s138
          %s140 = smul.u32 2, %s24
          %s142 = ssub.s32 32, 32
          %143 = vsyncadd %s136, %s142
          %s144 = smul.addr %s25, 2
          %s145 = sadd.s32 %s140, %s144
          %s146 = smul.addr %s145, 16
          %s147 = scalar_lea.hbm %s0, %s146
          %s149 = sshll.u32 %s139, 4
          %s150 = int_to_ptr.vmem [resolvable:$true] %s149
          %152 = dma.hbm_to_vmem [thread:$0]  %s147, 32, %s150, %s136
        $region20: #{tpu_custom_call.1} parent=15 // pred_fallthru
          _
        // Predicated region
        $region21: #{tpu_custom_call.1} parent=15 // pred_check
          %p153 = pneg %p79
        $region22: #{tpu_custom_call.1} parent=15 // pred_check_branch
          %155 = sbr.rel (%p153) target = $region24
        $region23: #{tpu_custom_call.1} parent=15 // pred_region
          %s156 = sand.u32 %s69, 1
          %s157 = scalar_lea.sflag [#allocation6], %s156
          %s158 = sand.u32 %s69, 1
          %s159 = smul.addr %s158, 8
          %s160 = scalar_lea.vmem [#allocation5], %s159
          %s161 = smul.u32 2, %s24
          %s163 = ssub.s32 128, 128
          %164 = vsyncadd %s157, %s163
          %s165 = smul.addr %s25, 2
          %s166 = sadd.s32 %s161, %s165
          %s167 = smul.addr %s166, 64
          %s168 = scalar_lea.hbm %s1, %s167
          %s170 = sshll.u32 %s160, 4
          %s171 = int_to_ptr.vmem [resolvable:$true] %s170
          %173 = dma.hbm_to_vmem [thread:$0]  %s168, 128, %s171, %s157
        $region24: #{tpu_custom_call.1} parent=15 // pred_fallthru
          _
      $region16: #{tpu_custom_call.1} parent=5 // pred_fallthru
        _
      %p174 = scmp.le.s32.totalorder 1, %s17
      %p175 = scmp.lt.s32.totalorder %s17, 3
      %p176 = pnand %p174, %p175
      %p177 = pneg %p176
      // Predicated region
      $region25: #{tpu_custom_call.1} parent=5 // pred_check
        _
      $region26: #{tpu_custom_call.1} parent=5 // pred_check_branch
        %179 = sbr.rel (%p176) target = $region28
      $region27: #{tpu_custom_call.1} parent=5 // pred_region
        %s180 = ssub.s32 %s17, 1
        %s181 = sand.u32 %s44, 1
        %s182 = scalar_lea.sflag [#allocation3], %s181
        %s183 = sand.u32 %s44, 1
        %s184 = smul.addr %s183, 2
        %s185 = scalar_lea.vmem [#allocation2], %s184
        // Predicated region
        $region29: #{tpu_custom_call.1} parent=27 // pred_check
          %p186 = pneg %p57
        $region30: #{tpu_custom_call.1} parent=27 // pred_check_branch
          %188 = sbr.rel (%p186) target = $region32
        $region31: #{tpu_custom_call.1} parent=27 // pred_region
          %189 = dma.done %s182, 32
        $region32: #{tpu_custom_call.1} parent=27 // pred_fallthru
          _
        %s190 = sand.u32 %s72, 1
        %s191 = scalar_lea.sflag [#allocation6], %s190
        %s192 = sand.u32 %s72, 1
        %s193 = smul.addr %s192, 8
        %s194 = scalar_lea.vmem [#allocation5], %s193
        // Predicated region
        $region33: #{tpu_custom_call.1} parent=27 // pred_check
          %p195 = pneg %p85
        $region34: #{tpu_custom_call.1} parent=27 // pred_check_branch
          %197 = sbr.rel (%p195) target = $region36
        $region35: #{tpu_custom_call.1} parent=27 // pred_region
          %198 = dma.done %s191, 128
        $region36: #{tpu_custom_call.1} parent=27 // pred_fallthru
          _
        %s199 = sand.u32 %s44, 1
        %s200 = scalar_lea.sflag [#allocation3], %s199
        %s201 = sand.u32 %s44, 1
        %s202 = smul.addr %s201, 2
        %s203 = scalar_lea.vmem [#allocation2], %s202
        %p204 = pneg %p57
        %p205 = pneg %p54
        %s206 = sand.u32 %s72, 1
        %s207 = scalar_lea.sflag [#allocation6], %s206
        %s208 = sand.u32 %s72, 1
        %s209 = smul.addr %s208, 8
        %s210 = scalar_lea.vmem [#allocation5], %s209
        %p211 = pneg %p85
        %p212 = pneg %p82
        %p213 = pneg %p113
        %p214 = pneg %p110
        %s215 = sand.u32 %s100, 1
        %s216 = scalar_lea.sflag [#allocation4], %s215
        %s217 = sand.u32 %s100, 1
        %s218 = smul.addr %s217, 8
        %s219 = scalar_lea.vmem [#allocation7], %s218
        %s220 = smul.u32 2, %s26
        %s221 = smul.u32 2, %s26
        %v222 = vld [vmem:[%s194] sm:$0xff]
        %v223 = vld [vmem:[%s185] sm:$0x3]
        %v225 = vcombine.high %v222, %v222
        %vm227 = vcmask 1043456
        %v228 = vsel %vm227, %v222, -inf
        %v229 = vrot.slane %v228, 4
        %v230 = vmax.f32 %v228, %v229
        %v231 = vrot.slane %v230, 2
        %v232 = vmax.f32 %v230, %v231
        %v233 = vrot.slane %v232, 1
        %v234 = vmax.f32 %v232, %v233
        %v235 = vsel %vm227, %v225, -inf
        %v236 = vrot.slane %v235, 4
        %v237 = vmax.f32 %v235, %v236
        %v238 = vrot.slane %v237, 2
        %v239 = vmax.f32 %v237, %v238
        %v240 = vrot.slane %v239, 1
        %v241 = vmax.f32 %v239, %v240
        %v244 = vcombine.low %v234, %v241
        %v246 = vsub.f32 %v222, %v244
        %v247 = vmul.f32 %v246, 1.442695
        %v248 = vpow.pop %v247
        %v250 = vcombine.high %v248, %v248
        %v252 = vsel %vm227, %v248, 0.0
        %v253 = vrot.slane %v252, 4
        %v254 = vadd.f32 %v252, %v253
        %v255 = vrot.slane %v254, 2
        %v256 = vadd.f32 %v254, %v255
        %v257 = vrot.slane %v256, 1
        %v258 = vadd.f32 %v256, %v257
        %v259 = vsel %vm227, %v250, 0.0
        %v260 = vrot.slane %v259, 4
        %v261 = vadd.f32 %v259, %v260
        %v262 = vrot.slane %v261, 2
        %v263 = vadd.f32 %v261, %v262
        %v264 = vrot.slane %v263, 1
        %v265 = vadd.f32 %v263, %v264
        %v266 = vlog2.pop %v258
        %v267 = vmul.f32 %v266, 0.6931472
        %v268 = vlog2.pop %v265
        %v269 = vmul.f32 %v268, 0.6931472
        %v270 = vlaneseq
        %v271 = vshrl.u32 %v270, 7
        %v272 = vlaneseq
        %v273 = vshrl.u32 %v272, 7
        %v274 = vsub.s32 0, %v273
        %v275 = vrot.slane %v223, %v274
        %v276 = vlaneseq
        %v277 = vshrl.u32 %v276, 7
        %v278 = vsub.s32 1, %v277
        %v279 = vrot.slane %v223, %v278
        %vm280 = vcmp.eq.s32.totalorder %v271, %v275
        %vm281 = vcmp.eq.s32.totalorder %v271, %v279
        %v283 = vcombine.high %v246, %v246
        %v285 = vsel %vm280, %v246, 0.0
        %v286 = vsel %vm281, %v283, 0.0
        %v287 = vsel %vm227, %v285, 0.0
        %v288 = vrot.slane %v287, 4
        %v289 = vadd.f32 %v287, %v288
        %v290 = vrot.slane %v289, 2
        %v291 = vadd.f32 %v289, %v290
        %v292 = vrot.slane %v291, 1
        %v293 = vadd.f32 %v291, %v292
        %v294 = vsel %vm227, %v286, 0.0
        %v295 = vrot.slane %v294, 4
        %v296 = vadd.f32 %v294, %v295
        %v297 = vrot.slane %v296, 2
        %v298 = vadd.f32 %v296, %v297
        %v299 = vrot.slane %v298, 1
        %v300 = vadd.f32 %v298, %v299
        %v301 = vsub.f32 %v293, %v267
        %v302 = vsub.f32 %v300, %v269
        %v303 = vmul.f32 %v301, 1.442695
        %v304 = vpow.pop %v303
        %v305 = vmul.f32 %v302, 1.442695
        %v306 = vpow.pop %v305
        %v307 = vsub.f32 1.0, %v304
        %v308 = vsub.f32 1.0, %v306
        %v309 = vmul.f32 %v307, %v307
        %v310 = vmul.f32 %v308, %v308
        %v311 = vsub.f32 0.0, %v309
        %v312 = vsub.f32 0.0, %v310
        %v313 = vmul.f32 %v311, %v301
        %v314 = vmul.f32 %v312, %v302
        %vm315 = vcmask 1040384
        %v316 = vsel %vm315, %v313, 0.0
        %v317 = vsel %vm315, %v314, 0.0
        %v318 = vadd.f32 %v316, %v317
        %319 = vadd.xlane.f32.xlu0 %v318
        %v320 = vpop.xlane.xlu0 %319
        %v321 = vrot.slane %v320, 4
        %v322 = vadd.f32 %v320, %v321
        %v323 = vrot.slane %v322, 2
        %v324 = vadd.f32 %v322, %v323
        %v325 = vrot.slane %v324, 1
        %v326 = vadd.f32 %v324, %v325
        %s327 = vtos %v326
        %v328 = vstv %s327
        %v329 = vadd.f32 %v328, 0.0
        %330 = vst [vmem:[%s219] sm:$0xff] %v329
        %s331 = sand.u32 %s100, 1
        %s332 = scalar_lea.sflag [#allocation4], %s331
        %s333 = sand.u32 %s100, 1
        %s334 = smul.addr %s333, 8
        %s335 = scalar_lea.vmem [#allocation7], %s334
        // Predicated region
        $region37: #{tpu_custom_call.1} parent=27 // pred_check
          %p336 = pneg %p110
        $region38: #{tpu_custom_call.1} parent=27 // pred_check_branch
          %338 = sbr.rel (%p336) target = $region40
        $region39: #{tpu_custom_call.1} parent=27 // pred_region
          %s340 = ssub.s32 128, 128
          %341 = vsyncadd %s332, %s340
          %s342 = smul.addr %s26, 2
          %s343 = sadd.s32 %s27, %s342
          %s344 = smul.addr %s343, 128
          %s345 = scalar_lea.hbm %s2, %s344
          %s347 = sshll.u32 %s335, 4
          %s348 = int_to_ptr.vmem [resolvable:$true] %s347
          %350 = dma.vmem_to_hbm [thread:$0]  %s348, 128, %s345, %s332
        $region40: #{tpu_custom_call.1} parent=27 // pred_fallthru
          _
      $region28: #{tpu_custom_call.1} parent=5 // pred_fallthru
        _
      %p351 = scmp.le.s32.totalorder 2, %s17
      // Predicated region
      $region41: #{tpu_custom_call.1} parent=5 // pred_check
        %p352 = pneg %p351
      $region42: #{tpu_custom_call.1} parent=5 // pred_check_branch
        %354 = sbr.rel (%p352) target = $region44
      $region43: #{tpu_custom_call.1} parent=5 // pred_region
        %s355 = ssub.s32 %s17, 2
        // Predicated region
        $region45: #{tpu_custom_call.1} parent=43 // pred_check
          %p356 = pneg %p116
        $region46: #{tpu_custom_call.1} parent=43 // pred_check_branch
          %358 = sbr.rel (%p356) target = $region48
        $region47: #{tpu_custom_call.1} parent=43 // pred_region
          %s359 = sand.u32 %s101, 1
          %s360 = scalar_lea.sflag [#allocation4], %s359
          %s361 = sand.u32 %s101, 1
          %s362 = smul.addr %s361, 8
          %s363 = scalar_lea.vmem [#allocation7], %s362
          %364 = dma.done %s360, 128
        $region48: #{tpu_custom_call.1} parent=43 // pred_fallthru
          _
      $region44: #{tpu_custom_call.1} parent=5 // pred_fallthru
        _
    $region6: #{tpu_custom_call.1} parent=1 // loop_footer
      %s21 = sadd.s32 1, %s17
    $region7: #{tpu_custom_call.1} parent=1 // loop_footer_branch
      %16 = sbr.rel target = $region3
    $region8: #{tpu_custom_call.1} parent=1 // loop_exit
      _
    %365 = vsyncpa [#allocation3], 1
    %s366 = scalar_lea.sflag [#allocation3], 1
    %367 = vsyncpa %s366, 1
    %368 = vsyncpa [#allocation6], 1
    %s369 = scalar_lea.sflag [#allocation6], 1
    %370 = vsyncpa %s369, 1
    %371 = vsyncpa [#allocation4], 1
    %s372 = scalar_lea.sflag [#allocation4], 1
    %373 = vsyncpa %s372, 1

</llo_original>
